<compile_context>
chip_gen: v7x
topology: tpu7x:2x2x1
jax: 0.10.0
libtpu: 0.0.40
codegen_flags: <defaults>
</compile_context>

<pallas_src>
import jax
import jax.numpy as jnp
from jax.experimental import pallas as pl
from jax.experimental.pallas import tpu as pltpu


# Packed parameter layout inside a single (16, 16) float32 buffer:
#   [0:10, 0:10]  W2^T   (10, 10)
#   [0:10, 10]    W1^T[:, 0]  == W1[0, :]
#   [0:10, 11]    W1^T[:, 1]  == W1[1, :]
#   [0:10, 12]    b1
#   [0:10, 13]    b2
#   [0:10, 14]    W3[:, 0]
#   [0,    15]    b3
_PACK_SHAPE = (16, 16)


def mlp_kernel(p_ref, xT_ref, o_ref):
    # Transposed layout: xT_ref is (2, Np), o_ref is (1, Np); batch on lanes.
    x0 = xT_ref[0:1, :]            # (1, Np)
    x1 = xT_ref[1:2, :]            # (1, Np)

    w1c0 = p_ref[0:10, 10:11]      # (10, 1)
    w1c1 = p_ref[0:10, 11:12]      # (10, 1)
    b1 = p_ref[0:10, 12:13]        # (10, 1)
    # Layer 1 (K=2): VPU broadcast-FMAs, no MXU tile push for 2 MACs of work.
    h1 = jnp.tanh(w1c0 * x0 + w1c1 * x1 + b1)                # (10, Np)

    w2T = p_ref[0:10, 0:10]        # (10, 10)
    b2 = p_ref[0:10, 13:14]        # (10, 1)
    # Layer 2 (10x10): the only layer worth the MXU; f32 accumulate.
    h2 = jnp.tanh(
        jnp.dot(w2T, h1, preferred_element_type=jnp.float32) + b2
    )                                                        # (10, Np)

    w3c = p_ref[0:10, 14:15]       # (10, 1)
    b3 = p_ref[0:1, 15:16]         # (1, 1)
    # Output layer (Nout=1): VPU multiply + sublane (XLU) reduce, no matmul.
    logits = jnp.sum(w3c * h2, axis=0, keepdims=True) + b3   # (1, Np)
    o_ref[...] = jax.nn.sigmoid(logits)


def pack_params(params):
    w1, b1, w2, b2, w3, b3 = params
    p = jnp.zeros(_PACK_SHAPE, jnp.float32)
    p = p.at[0:10, 0:10].set(w2.T)
    p = p.at[0:10, 10].set(w1[0, :])
    p = p.at[0:10, 11].set(w1[1, :])
    p = p.at[0:10, 12].set(b1.reshape(-1))
    p = p.at[0:10, 13].set(b2.reshape(-1))
    p = p.at[0:10, 14].set(w3.reshape(-1))
    p = p.at[0, 15].set(b3.reshape(-1)[0])
    return p


def net_forward(x, packed_params):
    n, f_in = x.shape
    n_pad = max(128, ((n + 127) // 128) * 128)   # lane-dense batch axis

    # Wrapper-side layout plumbing: transpose + zero-pad the batch axis.
    xT = jnp.zeros((f_in, n_pad), jnp.float32).at[:, :n].set(x.T)

    vmem = pl.BlockSpec(memory_space=pltpu.MemorySpace.VMEM)
    cost = pl.CostEstimate(
        flops=2 * n_pad * (2 * 10 + 10 * 10 + 10),
        transcendentals=21 * n_pad,
        bytes_accessed=(xT.size + packed_params.size + n_pad) * 4,
    )
    # TODO(synk): if the batch is ever scaled up, add a grid over n_pad with
    # dimension_semantics=("parallel",) so both v7x TensorCores are used.
    outT = pl.pallas_call(
        mlp_kernel,
        out_shape=jax.ShapeDtypeStruct((1, n_pad), jnp.float32),
        in_specs=[vmem, vmem],
        out_specs=vmem,
        cost_estimate=cost,
    )(packed_params, xT)
    return outT[:, :n].T                           # (n, 1)


def init_params(key):
    # Deterministic parameter init mirroring the module's __init__:
    #   w_init = RandomUniform()  -> uniform in [-1, 1)
    #   b_init = Constant(0.1)    -> 0.1 for l1/l2; default (zeros) for out.
    k1, k2, k3 = jax.random.split(key, 3)
    w1 = jax.random.uniform(k1, (2, 10), jnp.float32, minval=-1.0, maxval=1.0)
    b1 = jnp.full((1, 10), 0.1, jnp.float32)
    w2 = jax.random.uniform(k2, (10, 10), jnp.float32, minval=-1.0, maxval=1.0)
    b2 = jnp.full((1, 10), 0.1, jnp.float32)
    w3 = jax.random.uniform(k3, (10, 1), jnp.float32, minval=-1.0, maxval=1.0)
    b3 = jnp.zeros((1, 1), jnp.float32)
    return (w1, b1, w2, b2, w3, b3)


if __name__ == "__main__":
    key = jax.random.PRNGKey(0)
    kx0, kx1, kp = jax.random.split(key, 3)

    # Mirror the script-level data construction:
    #   x0 ~ N(-2, 1) of shape (100, 2); x1 ~ N(2, 1) of shape (100, 2)
    x0 = jax.random.normal(kx0, (100, 2), jnp.float32) - 2.0
    x1 = jax.random.normal(kx1, (100, 2), jnp.float32) + 2.0
    x = jnp.concatenate((x0, x1), axis=0)  # (200, 2)

    params = init_params(kp)
    packed = pack_params(params)

    out = net_forward(x, packed)
    out = jax.block_until_ready(out)

    # Sanity check against a pure-JAX reference (original (N, F) layout).
    w1, b1, w2, b2, w3, b3 = params
    h1 = jnp.tanh(x @ w1 + b1)
    h2 = jnp.tanh(h1 @ w2 + b2)
    ref = jax.nn.sigmoid(h2 @ w3 + b3)
    assert out.shape == (200, 1)
    assert jnp.allclose(out, ref, atol=1e-5, rtol=1e-5)

    print("KERNEL_OK")
</pallas_src>

<mosaic_0001>
module attributes {stable_mosaic.version = 11 : i64} {
  func.func @mlp_kernel(%arg0: memref<16x16xf32, #tpu.memory_space<vmem>>, %arg1: memref<2x256xf32, #tpu.memory_space<vmem>>, %arg2: memref<1x256xf32, #tpu.memory_space<vmem>>) attributes {dimension_semantics = [], scalar_prefetch = 0 : i64, scratch_operands = 0 : i64, tpu.core_type = #tpu.core_type<tc>} {
    %c0 = arith.constant 0 : index
    %c0_0 = arith.constant 0 : index
    %0 = vector.load %arg1[%c0, %c0_0] : memref<2x256xf32, #tpu.memory_space<vmem>>, vector<1x256xf32>
    %c1 = arith.constant 1 : index
    %c0_1 = arith.constant 0 : index
    %1 = vector.load %arg1[%c1, %c0_1] : memref<2x256xf32, #tpu.memory_space<vmem>>, vector<1x256xf32>
    %c0_2 = arith.constant 0 : index
    %c10 = arith.constant 10 : index
    %2 = vector.load %arg0[%c0_2, %c10] : memref<16x16xf32, #tpu.memory_space<vmem>>, vector<10x1xf32>
    %c0_3 = arith.constant 0 : index
    %c11 = arith.constant 11 : index
    %3 = vector.load %arg0[%c0_3, %c11] : memref<16x16xf32, #tpu.memory_space<vmem>>, vector<10x1xf32>
    %c0_4 = arith.constant 0 : index
    %c12 = arith.constant 12 : index
    %4 = vector.load %arg0[%c0_4, %c12] : memref<16x16xf32, #tpu.memory_space<vmem>>, vector<10x1xf32>
    %5 = vector.broadcast %2 : vector<10x1xf32> to vector<10x256xf32>
    %6 = vector.broadcast %0 : vector<1x256xf32> to vector<10x256xf32>
    %7 = arith.mulf %5, %6 : vector<10x256xf32>
    %8 = vector.broadcast %3 : vector<10x1xf32> to vector<10x256xf32>
    %9 = vector.broadcast %1 : vector<1x256xf32> to vector<10x256xf32>
    %10 = arith.mulf %8, %9 : vector<10x256xf32>
    %11 = arith.addf %7, %10 : vector<10x256xf32>
    %12 = vector.broadcast %4 : vector<10x1xf32> to vector<10x256xf32>
    %13 = arith.addf %11, %12 : vector<10x256xf32>
    %14 = math.tanh %13 : vector<10x256xf32>
    %c0_5 = arith.constant 0 : index
    %c0_6 = arith.constant 0 : index
    %15 = vector.load %arg0[%c0_5, %c0_6] : memref<16x16xf32, #tpu.memory_space<vmem>>, vector<10x10xf32>
    %c0_7 = arith.constant 0 : index
    %c13 = arith.constant 13 : index
    %16 = vector.load %arg0[%c0_7, %c13] : memref<16x16xf32, #tpu.memory_space<vmem>>, vector<10x1xf32>
    %cst = arith.constant dense<0.000000e+00> : vector<10x256xf32>
    %17 = tpu.matmul %15, %14, %cst {dimension_numbers = #tpu.dot_dimension_numbers<[1], [0], [0], [1], [0, 0, 1, 1], [], []>} : vector<10x10xf32>, vector<10x256xf32>, vector<10x256xf32> -> vector<10x256xf32>
    %18 = vector.broadcast %16 : vector<10x1xf32> to vector<10x256xf32>
    %19 = arith.addf %17, %18 : vector<10x256xf32>
    %20 = math.tanh %19 : vector<10x256xf32>
    %c0_8 = arith.constant 0 : index
    %c14 = arith.constant 14 : index
    %21 = vector.load %arg0[%c0_8, %c14] : memref<16x16xf32, #tpu.memory_space<vmem>>, vector<10x1xf32>
    %c0_9 = arith.constant 0 : index
    %c15 = arith.constant 15 : index
    %22 = vector.load %arg0[%c0_9, %c15] : memref<16x16xf32, #tpu.memory_space<vmem>>, vector<1x1xf32>
    %23 = vector.broadcast %21 : vector<10x1xf32> to vector<10x256xf32>
    %24 = arith.mulf %23, %20 : vector<10x256xf32>
    %cst_10 = arith.constant dense<0.000000e+00> : vector<256xf32>
    %25 = vector.multi_reduction <add>, %24, %cst_10 [0] : vector<10x256xf32> to vector<256xf32>
    %26 = vector.shape_cast %25 : vector<256xf32> to vector<1x256xf32>
    %27 = vector.broadcast %22 : vector<1x1xf32> to vector<1x256xf32>
    %28 = arith.addf %26, %27 : vector<1x256xf32>
    %29 = arith.negf %28 : vector<1x256xf32>
    %30 = math.exp %29 : vector<1x256xf32>
    %cst_11 = arith.constant 1.000000e+00 : f32
    %31 = vector.broadcast %cst_11 : f32 to vector<1x256xf32>
    %32 = arith.addf %31, %30 : vector<1x256xf32>
    %33 = arith.divf %31, %32 : vector<1x256xf32>
    %c0_12 = arith.constant 0 : index
    %c0_13 = arith.constant 0 : index
    %34 = vector.load %arg2[%c0_12, %c0_13] : memref<1x256xf32, #tpu.memory_space<vmem>>, vector<1x256xf32>
    tpu.vector_store %arg2[%c0_12, %c0_13], %33 {strides = array<i32>} : memref<1x256xf32, #tpu.memory_space<vmem>>, vector<1x256xf32>,
    return
  }
}

</mosaic_0001>

<llo_original>
// kernel: tpu_custom_call.1
$region0: #{tpu_custom_call.1}
  #allocation0 [shape = 'u32[]', space=smem, size = 0x4, offset = 0x4, fixed_abs, tag = 'smem constant byte address 0x4 - core index']
  #allocation1 [shape = 'u32[144,128]{1,0:T(1,128)}', space=vmem, size = 0x12000, scoped, tag = 'internal scratch']
  %s0 = inlined_call_operand.hbm [shape: f32[16,16], index: 0, kind: input, shape index: {}]
  %s1 = inlined_call_operand.hbm [shape: f32[2,256], index: 1, kind: input, shape index: {}]
  %s2 = inlined_call_operand.hbm [shape: f32[1,256], index: 2, kind: output, shape index: {}]
  %s3 = sld [smem:[#allocation0]]
  $region26: #{tpu_custom_call.1} parent=0
    _
  %s5 = ssub.s32 1, %s3
  %s6 = scalar_select 0, %s5, %s3
  $region1: #{tpu_custom_call.1} parent=0
    #allocation2 [shape = 'u8[8192]{0}', space=vmem, size = 0x2000, scoped, tag = 'input window, operand 0, single buffered']
    #allocation3 [shape = 's32[1]{0}', space=sflag, size = 0x4, scoped, tag = 'scoped memory for tpu_custom_call.1']
    #allocation4 [shape = 's32[1]{0}', space=sflag, size = 0x4, scoped, tag = 'scoped memory for tpu_custom_call.1']
    #allocation5 [shape = 'u8[2048]{0}', space=vmem, size = 0x800, scoped, tag = 'input window, operand 1, single buffered']
    #allocation6 [shape = 's32[1]{0}', space=sflag, size = 0x4, scoped, tag = 'scoped memory for tpu_custom_call.1']
    #allocation7 [shape = 'u8[1024]{0}', space=vmem, size = 0x400, scoped, tag = 'output window, operand 0, single buffered']
    %7 = vsyncpa [#allocation3], 0
    %8 = vsyncpa [#allocation6], 0
    %9 = vsyncpa [#allocation4], 0
    // Predicated region
    $region2: #{tpu_custom_call.1} parent=1 // pred_check
      _
    $region3: #{tpu_custom_call.1} parent=1 // pred_check_branch
      %11 = sbr.rel (0) target = $region5
    $region4: #{tpu_custom_call.1} parent=1 // pred_region
      %s13 = ssub.s32 256, 256
      %14 = vsyncadd [#allocation3], %s13
      %s15 = sshll.u32 [#allocation2], 4
      %s16 = int_to_ptr.vmem [resolvable:$true] %s15
      %21 = dma.hbm_to_vmem [thread:$0]  %s0, 256, %s16, [#allocation3], 128, 128, 8
    $region5: #{tpu_custom_call.1} parent=1 // pred_fallthru
      _
    // Predicated region
    $region6: #{tpu_custom_call.1} parent=1 // pred_check
      _
    $region7: #{tpu_custom_call.1} parent=1 // pred_check_branch
      %23 = sbr.rel (0) target = $region9
    $region8: #{tpu_custom_call.1} parent=1 // pred_region
      %s25 = ssub.s32 64, 64
      %26 = vsyncadd [#allocation6], %s25
      %s28 = sshll.u32 [#allocation5], 4
      %s29 = int_to_ptr.vmem [resolvable:$true] %s28
      %31 = dma.hbm_to_vmem [thread:$0]  %s1, 64, %s29, [#allocation6]
    $region9: #{tpu_custom_call.1} parent=1 // pred_fallthru
      _
    // Predicated region
    $region10: #{tpu_custom_call.1} parent=1 // pred_check
      _
    $region11: #{tpu_custom_call.1} parent=1 // pred_check_branch
      %33 = sbr.rel (0) target = $region13
    $region12: #{tpu_custom_call.1} parent=1 // pred_region
      %34 = dma.done [#allocation3], 256
    $region13: #{tpu_custom_call.1} parent=1 // pred_fallthru
      _
    // Predicated region
    $region14: #{tpu_custom_call.1} parent=1 // pred_check
      _
    $region15: #{tpu_custom_call.1} parent=1 // pred_check_branch
      %36 = sbr.rel (0) target = $region17
    $region16: #{tpu_custom_call.1} parent=1 // pred_region
      %37 = dma.done [#allocation6], 64
    $region17: #{tpu_custom_call.1} parent=1 // pred_fallthru
      _
    %v38 = vld [vmem:[#allocation5] ss:$2 sm:$0x3]
    %s39 = scalar_lea.vmem [#allocation5], 1
    %v40 = vld [vmem:[%s39] ss:$2 sm:$0x3]
    %v41 = vld [vmem:[#allocation2] sm:$0xff]
    %v42 = vld [vmem:[#allocation2 + $0x8] sm:$0x3]
    %44 = vset.pattern.permute.xlu0 10
    %45 = vperm.xlu0 %44, %v41
    %v46 = vpop.permute.xlu0 %45
    %49 = vset.pattern.permute.xlu0 10
    %50 = vperm.xlu0 %49, %v42
    %v51 = vpop.permute.xlu0 %50
    %v54 = vlaneseq
    %v55 = vshrl.u32 %v54, 7
    %v56 = vsub.s32 0, %v55
    %v57 = vrot.slane %v38, %v56
    %v58 = vlaneseq
    %v59 = vshrl.u32 %v58, 7
    %v60 = vsub.s32 1, %v59
    %v61 = vrot.slane %v38, %v60
    %v64 = vmul.f32 %v46, %v57
    %v65 = vmul.f32 %v46, %v61
    %v66 = vmul.f32 %v51, %v57
    %v67 = vmul.f32 %v51, %v61
    %68 = vset.pattern.permute.xlu0 11
    %69 = vperm.xlu0 %68, %v41
    %v70 = vpop.permute.xlu0 %69
    %72 = vset.pattern.permute.xlu0 11
    %73 = vperm.xlu0 %72, %v42
    %v74 = vpop.permute.xlu0 %73
    %v77 = vlaneseq
    %v78 = vshrl.u32 %v77, 7
    %v79 = vsub.s32 0, %v78
    %v80 = vrot.slane %v40, %v79
    %v81 = vlaneseq
    %v82 = vshrl.u32 %v81, 7
    %v83 = vsub.s32 1, %v82
    %v84 = vrot.slane %v40, %v83
    %v87 = vmul.f32 %v70, %v80
    %v88 = vmul.f32 %v70, %v84
    %v89 = vmul.f32 %v74, %v80
    %v90 = vmul.f32 %v74, %v84
    %v91 = vadd.f32 %v64, %v87
    %v92 = vadd.f32 %v65, %v88
    %v93 = vadd.f32 %v66, %v89
    %v94 = vadd.f32 %v67, %v90
    %95 = vset.pattern.permute.xlu0 12
    %96 = vperm.xlu0 %95, %v41
    %v97 = vpop.permute.xlu0 %96
    %99 = vset.pattern.permute.xlu0 12
    %100 = vperm.xlu0 %99, %v42
    %v101 = vpop.permute.xlu0 %100
    %v103 = vadd.f32 %v91, %v97
    %v104 = vadd.f32 %v92, %v97
    %v105 = vadd.f32 %v93, %v101
    %v106 = vadd.f32 %v94, %v101
    %v107 = vtanh.pop %v103
    %v108 = vtanh.pop %v104
    %v109 = vtanh.pop %v105
    %v110 = vtanh.pop %v106
    %111 = vset.pattern.permute.xlu0 13
    %112 = vperm.xlu0 %111, %v41
    %v113 = vpop.permute.xlu0 %112
    %115 = vset.pattern.permute.xlu0 13
    %116 = vperm.xlu0 %115, %v42
    %v117 = vpop.permute.xlu0 %116
    %vm119 = vcmask 80896
    %v120 = vsel %vm119, %v41, 0
    %v122 = vsel %vm119, %v42, 0
    %vm124 = vcmask 1041408
    %v126 = vsel %vm124, %v109, 0
    %v129 = vsel %vm124, %v110, 0
    %131 = vmatprep.subr.mxu0 %v108
    %132 = vmatpush1.msra.mxu0 %v107
    %133 = vmatprep.subr.mxu0 %v129
    %134 = vmatpush1.msra.mxu0 %v126
    %135 = vmatprep.subr.mxu0 0.0
    %136 = vmatpush1.msra.mxu0 0.0
    %137 = vmatprep.subr.mxu0 0.0
    %138 = vmatpush1.msra.mxu0 0.0
    %139 = vmatprep.subr.mxu0 0.0
    %140 = vmatpush1.msra.mxu0 0.0
    %141 = vmatprep.subr.mxu0 0.0
    %142 = vmatpush1.msra.mxu0 0.0
    %143 = vmatprep.subr.mxu0 0.0
    %144 = vmatpush1.msra.mxu0 0.0
    %145 = vmatprep.subr.mxu0 0.0
    %146 = vmatpush1.msra.mxu0 0.0
    %147 = vmatprep.subr.mxu0 0.0
    %148 = vmatpush1.msra.mxu0 0.0
    %149 = vmatprep.subr.mxu0 0.0
    %150 = vmatpush1.msra.mxu0 0.0
    %151 = vmatprep.subr.mxu0 0.0
    %152 = vmatpush1.msra.mxu0 0.0
    %153 = vmatprep.subr.mxu0 0.0
    %154 = vmatpush1.msra.mxu0 0.0
    %155 = vmatprep.subr.mxu0 0.0
    %156 = vmatpush1.msra.mxu0 0.0
    %157 = vmatprep.subr.mxu0 0.0
    %158 = vmatpush1.msra.mxu0 0.0
    %159 = vmatprep.subr.mxu0 0.0
    %160 = vmatpush1.msra.mxu0 0.0
    %161 = vmatprep.subr.mxu0 0.0
    %162 = vmatpush1.msra.mxu0 0.0
    %163 = vmatprep.subr.mxu0 0.0
    %164 = vmatpush1.msra.mxu0 0.0
    %165 = vmatprep.subr.mxu0 0.0
    %166 = vmatpush1.msra.mxu0 0.0
    %167 = vmatprep.subr.mxu0 0.0
    %168 = vmatpush1.msra.mxu0 0.0
    %169 = vmatprep.subr.mxu0 0.0
    %170 = vmatpush1.msra.mxu0 0.0
    %171 = vmatprep.subr.mxu0 0.0
    %172 = vmatpush1.msra.mxu0 0.0
    %173 = vmatprep.subr.mxu0 0.0
    %174 = vmatpush1.msra.mxu0 0.0
    %175 = vmatprep.subr.mxu0 0.0
    %176 = vmatpush1.msra.mxu0 0.0
    %177 = vmatprep.subr.mxu0 0.0
    %178 = vmatpush1.msra.mxu0 0.0
    %179 = vmatprep.subr.mxu0 0.0
    %180 = vmatpush1.msra.mxu0 0.0
    %181 = vmatprep.subr.mxu0 0.0
    %182 = vmatpush1.msra.mxu0 0.0
    %183 = vmatprep.subr.mxu0 0.0
    %184 = vmatpush1.msra.mxu0 0.0
    %185 = vmatprep.subr.mxu0 0.0
    %186 = vmatpush1.msra.mxu0 0.0
    %187 = vmatprep.subr.mxu0 0.0
    %188 = vmatpush1.msra.mxu0 0.0
    %189 = vmatprep.subr.mxu0 0.0
    %190 = vmatpush1.msra.mxu0 0.0
    %191 = vmatprep.subr.mxu0 0.0
    %192 = vmatpush1.msra.mxu0 0.0
    %193 = vmatprep.subr.mxu0 0.0
    %194 = vmatpush1.msra.mxu0 0.0
    %195 = vmatprep.mubr.f32.mxu0 0.0
    %196 = vmatmul.mubr.f32.gmra.mrb[0].mxu0 %v120
    %v197 = vpop.f32.mrb[0].mxu0
    %v198 = vadd.f32 %v113, %v197
    %v199 = vpop.f32.mrb[0].mxu0
    %v200 = vadd.f32 %v113, %v199
    %201 = vmatprep.mubr.f32.mxu0 0.0
    %202 = vmatmul.mubr.f32.gmra.mrb[0].mxu0 %v122
    %v203 = vpop.f32.mrb[0].mxu0
    %v204 = vadd.f32 %v117, %v203
    %v205 = vpop.f32.mrb[0].mxu0
    %v206 = vadd.f32 %v117, %v205
    %207 = vdwg.mxu0
    %v208 = vtanh.pop %v198
    %v209 = vtanh.pop %v200
    %v210 = vtanh.pop %v204
    %v211 = vtanh.pop %v206
    %v212 = vld [vmem:[#allocation2] sm:$0x1]
    %213 = vset.pattern.permute.xlu0 14
    %214 = vperm.xlu0 %213, %v41
    %v215 = vpop.permute.xlu0 %214
    %217 = vset.pattern.permute.xlu0 14
    %218 = vperm.xlu0 %217, %v42
    %v219 = vpop.permute.xlu0 %218
    %v221 = vmul.f32 %v215, %v208
    %v222 = vmul.f32 %v215, %v209
    %v223 = vmul.f32 %v219, %v210
    %v224 = vmul.f32 %v219, %v211
    %v225 = vsel %vm124, %v223, 0.0
    %v226 = vadd.f32 %v221, %v225
    %v227 = vrot.slane %v226, 4
    %v228 = vadd.f32 %v226, %v227
    %v229 = vrot.slane %v228, 2
    %v230 = vadd.f32 %v228, %v229
    %v231 = vrot.slane %v230, 1
    %v232 = vadd.f32 %v230, %v231
    %v233 = vsel %vm124, %v224, 0.0
    %v234 = vadd.f32 %v222, %v233
    %v235 = vrot.slane %v234, 4
    %v236 = vadd.f32 %v234, %v235
    %v237 = vrot.slane %v236, 2
    %v238 = vadd.f32 %v236, %v237
    %v239 = vrot.slane %v238, 1
    %v240 = vadd.f32 %v238, %v239
    %242 = vset.pattern.permute.xlu0 15
    %243 = vperm.xlu0 %242, %v212
    %v244 = vpop.permute.xlu0 %243
    %v246 = vadd.f32 %v232, %v244
    %v247 = vadd.f32 %v240, %v244
    %v248 = vxor.u32 %v246, 2147483648
    %v249 = vxor.u32 %v247, 2147483648
    %v250 = vmul.f32 %v248, 1.442695
    %v251 = vpow.pop %v250
    %v252 = vmul.f32 %v249, 1.442695
    %v253 = vpow.pop %v252
    %v254 = vadd.f32 %v251, 1.0
    %v255 = vadd.f32 %v253, 1.0
    %v256 = vrcp.pop %v254
    %v257 = vmul.f32 1.0, %v256
    %v258 = vrcp.pop %v255
    %v259 = vmul.f32 1.0, %v258
    %v262 = vcombine.low %v257, %v259
    %v264 = vunpack.c.l.s4 1966171168
    %v265 = vunpack.c.0.s8 %v264
    %v266 = vlaneseq
    %v267 = vshrl.u32 %v266, 7
    %v268 = vsub.s32 %v265, %v267
    %v269 = vrot.slane %v262, %v268
    %v271 = vunpack.c.l.s4 1966171168
    %v272 = vunpack.c.0.s8 %v271
    %v273 = vlaneseq
    %v274 = vshrl.u32 %v273, 7
    %v275 = vsub.s32 %v272, %v274
    %v276 = vrot.slane %v269, %v275
    %v278 = vlaneseq
    %vm279 = vcmp.ge.s32.totalorder %v278, 0
    %vm280 = vcmp.lt.s32.totalorder %v278, 256
    %vm281 = vmand %vm279, %vm280
    %282 = vst.msk [vmem:[#allocation7] sm:$0x3] %vm281, %v276
    // Predicated region
    $region18: #{tpu_custom_call.1} parent=1 // pred_check
      _
    $region19: #{tpu_custom_call.1} parent=1 // pred_check_branch
      %284 = sbr.rel (0) target = $region21
    $region20: #{tpu_custom_call.1} parent=1 // pred_region
      %s286 = ssub.s32 32, 32
      %287 = vsyncadd [#allocation4], %s286
      %s289 = sshll.u32 [#allocation7], 4
      %s290 = int_to_ptr.vmem [resolvable:$true] %s289
      %292 = dma.vmem_to_hbm [thread:$0]  %s290, 32, %s2, [#allocation4]
    $region21: #{tpu_custom_call.1} parent=1 // pred_fallthru
      _
    // Predicated region
    $region22: #{tpu_custom_call.1} parent=1 // pred_check
      _
    $region23: #{tpu_custom_call.1} parent=1 // pred_check_branch
      %294 = sbr.rel (0) target = $region25
    $region24: #{tpu_custom_call.1} parent=1 // pred_region
      %295 = dma.done [#allocation4], 32
    $region25: #{tpu_custom_call.1} parent=1 // pred_fallthru
      _
    %296 = vsyncpa [#allocation3], 1
    %297 = vsyncpa [#allocation6], 1
    %298 = vsyncpa [#allocation4], 1

</llo_original>
